<compile_context>
chip_gen: v7x
topology: tpu7x:2x2x1
jax: 0.10.0
libtpu: 0.0.40
codegen_flags: <defaults>
</compile_context>

<pallas_src>
import jax
import jax.numpy as jnp
from jax.experimental import pallas as pl
from jax.experimental.pallas import tpu as pltpu

HIDDEN = 128   # fixed by the module definition
LANES = 128    # TPU lane width; output slab width for lane-dense stores
TM_CAP = 2048  # batch-tile cap: 2 x (2048 x 784 x 4B) ~= 12.8 MiB fits v7x VMEM budget


def _disc_kernel(x_ref, w1_ref, b1_ref, w2r_ref, b2_ref, o_ref):
    # ---- Linear(img_dim -> 128) on the MXU, f32 accumulation ----
    h = jnp.dot(x_ref[...], w1_ref[...], preferred_element_type=jnp.float32)  # (TM, 128)
    h = h + b1_ref[...]                                                        # (1, 128) broadcast
    # ---- LeakyReLU(0.1), keep math in f32 (v5e VPU has no bf16) ----
    h = jnp.where(h > 0.0, h, 0.1 * h)
    # ---- Linear(128 -> 1) as VPU mul + XLU lane reduction (skip N=1 matmul) ----
    z = jnp.sum(h * w2r_ref[...], axis=-1, keepdims=True)                      # (TM, 1)
    z = z + b2_ref[0]                                                          # scalar bias from SMEM
    # ---- Sigmoid via a single EUP tanh: sigmoid(z) = 0.5*(tanh(z/2)+1) ----
    p = 0.5 * (jnp.tanh(0.5 * z) + 1.0)                                        # (TM, 1)
    # ---- lane-dense store: broadcast across 128 lanes, wrapper slices col 0 ----
    o_ref[...] = jnp.broadcast_to(p, o_ref.shape).astype(o_ref.dtype)


def _round_up(n, m):
    return ((n + m - 1) // m) * m


def discriminator_forward(x, w1, b1, w2, b2, tm=None):
    """x: (B, D). w1: (D, 128), b1: (1, 128), w2: (128, 1), b2: (1, 1).
    Returns (B, 1) float32, matching PyTorch forward semantics."""
    B, D = x.shape
    assert w1.shape == (D, HIDDEN)
    assert b1.shape == (1, HIDDEN)
    assert w2.shape == (HIDDEN, 1)
    assert b2.shape == (1, 1)

    # Batch tile: as large as comfortably fits VMEM (double-buffered), multiple of 8.
    if tm is None:
        tm = min(TM_CAP, _round_up(B, 8))
    tm = max(8, _round_up(tm, 8))
    grid = (pl.cdiv(B, tm),)

    w2_row = w2.reshape(1, HIDDEN).astype(jnp.float32)  # (1, 128) row vector for VPU mul
    b2_s = b2.reshape(1).astype(jnp.float32)            # (1,) scalar, lives in SMEM

    out_padded = pl.pallas_call(
        _disc_kernel,
        out_shape=jax.ShapeDtypeStruct((B, LANES), jnp.float32),
        grid_spec=pltpu.PrefetchScalarGridSpec(
            num_scalar_prefetch=0,
            grid=grid,
            in_specs=[
                # x: streamed per batch tile (double-buffered by the BlockSpec pipeline)
                pl.BlockSpec((tm, D), lambda i: (i, 0)),
                # weights/biases: constant block index -> stay VMEM-resident across the loop
                pl.BlockSpec((D, HIDDEN), lambda i: (0, 0)),
                pl.BlockSpec((1, HIDDEN), lambda i: (0, 0)),
                pl.BlockSpec((1, HIDDEN), lambda i: (0, 0)),
                # scalar bias in SMEM (avoids a padded (8,128) VMEM tile + DMA)
                pl.BlockSpec(memory_space=pltpu.MemorySpace.SMEM),
            ],
            out_specs=pl.BlockSpec((tm, LANES), lambda i: (i, 0)),
        ),
        compiler_params=pltpu.CompilerParams(
            dimension_semantics=("parallel",),  # megacore sharding on v7x
        ),
    )(x, w1, b1, w2_row, b2_s)

    # Lane-dense slab -> (B, 1): every lane holds the same value, take column 0.
    return out_padded[:, :1]


def init_params(key, img_dim):
    """Deterministic init mimicking PyTorch nn.Linear default: U(-1/sqrt(fan_in), 1/sqrt(fan_in))."""
    k1, k2, k3, k4 = jax.random.split(key, 4)
    bound1 = 1.0 / jnp.sqrt(img_dim)
    bound2 = 1.0 / jnp.sqrt(HIDDEN)
    w1 = jax.random.uniform(k1, (img_dim, HIDDEN), jnp.float32, -bound1, bound1)
    b1 = jax.random.uniform(k2, (1, HIDDEN), jnp.float32, -bound1, bound1)
    w2 = jax.random.uniform(k3, (HIDDEN, 1), jnp.float32, -bound2, bound2)
    b2 = jax.random.uniform(k4, (1, 1), jnp.float32, -bound2, bound2)
    return w1, b1, w2, b2


def reference_forward(x, w1, b1, w2, b2):
    h = x @ w1 + b1
    h = jnp.where(h > 0, h, 0.1 * h)
    z = h @ w2 + b2
    return jax.nn.sigmoid(z)


if __name__ == "__main__":
    key = jax.random.PRNGKey(0)
    k_x, k_p = jax.random.split(key)

    batch, img_dim = 24, 256  # small shapes (img_dim would be 784 for MNIST)
    x = jax.random.normal(k_x, (batch, img_dim), dtype=jnp.float32)
    w1, b1, w2, b2 = init_params(k_p, img_dim)

    # Force tm=8 so the batch-tiled grid path (3 steps, resident weights) is exercised.
    out = discriminator_forward(x, w1, b1, w2, b2, tm=8)
    out = jax.block_until_ready(out)

    ref = reference_forward(x, w1, b1, w2, b2)
    assert out.shape == (batch, 1)
    assert jnp.allclose(out, ref, atol=1e-5, rtol=1e-5), "mismatch vs pure-JAX reference"

    print("KERNEL_OK")
</pallas_src>

<mosaic_0001>
module attributes {stable_mosaic.version = 11 : i64} {
  func.func @_disc_kernel(%arg0: i32, %arg1: memref<8x256xf32, #tpu.memory_space<vmem>>, %arg2: memref<256x128xf32, #tpu.memory_space<vmem>>, %arg3: memref<1x128xf32, #tpu.memory_space<vmem>>, %arg4: memref<1x128xf32, #tpu.memory_space<vmem>>, %arg5: memref<1xf32, #tpu.memory_space<smem>>, %arg6: memref<8x128xf32, #tpu.memory_space<vmem>>) attributes {dimension_semantics = [#tpu.dimension_semantics<parallel>], iteration_bounds = array<i64: 3>, scalar_prefetch = 0 : i64, scratch_operands = 0 : i64, tpu.core_type = #tpu.core_type<tc>, window_params = [{transform_indices = @transform_0, window_bounds = array<i64: 8, 256>}, {pipeline_mode = #tpu.pipeline_mode<synchronous>, transform_indices = @transform_1, window_bounds = array<i64: 256, 128>}, {pipeline_mode = #tpu.pipeline_mode<synchronous>, transform_indices = @transform_2, window_bounds = array<i64: 1, 128>}, {pipeline_mode = #tpu.pipeline_mode<synchronous>, transform_indices = @transform_3, window_bounds = array<i64: 1, 128>}, {transform_indices = @transform_4, window_bounds = array<i64: 1>}, {transform_indices = @transform_5, window_bounds = array<i64: 8, 128>}]} {
    %c0 = arith.constant 0 : index
    %c0_0 = arith.constant 0 : index
    %0 = vector.load %arg1[%c0, %c0_0] : memref<8x256xf32, #tpu.memory_space<vmem>>, vector<8x256xf32>
    %c0_1 = arith.constant 0 : index
    %c0_2 = arith.constant 0 : index
    %1 = vector.load %arg2[%c0_1, %c0_2] : memref<256x128xf32, #tpu.memory_space<vmem>>, vector<256x128xf32>
    %cst = arith.constant dense<0.000000e+00> : vector<8x128xf32>
    %2 = tpu.matmul %0, %1, %cst {dimension_numbers = #tpu.dot_dimension_numbers<[1], [0], [0], [1], [0, 0, 1, 1], [], []>} : vector<8x256xf32>, vector<256x128xf32>, vector<8x128xf32> -> vector<8x128xf32>
    %c0_3 = arith.constant 0 : index
    %c0_4 = arith.constant 0 : index
    %3 = vector.load %arg3[%c0_3, %c0_4] : memref<1x128xf32, #tpu.memory_space<vmem>>, vector<1x128xf32>
    %4 = vector.broadcast %3 : vector<1x128xf32> to vector<8x128xf32>
    %5 = arith.addf %2, %4 : vector<8x128xf32>
    %cst_5 = arith.constant 0.000000e+00 : f32
    %6 = vector.broadcast %cst_5 : f32 to vector<8x128xf32>
    %7 = arith.cmpf ogt, %5, %6 : vector<8x128xf32>
    %cst_6 = arith.constant 1.000000e-01 : f32
    %8 = vector.broadcast %cst_6 : f32 to vector<8x128xf32>
    %9 = arith.mulf %8, %5 : vector<8x128xf32>
    %10 = arith.select %7, %5, %9 : vector<8x128xi1>, vector<8x128xf32>
    %c0_7 = arith.constant 0 : index
    %c0_8 = arith.constant 0 : index
    %11 = vector.load %arg4[%c0_7, %c0_8] : memref<1x128xf32, #tpu.memory_space<vmem>>, vector<1x128xf32>
    %12 = vector.broadcast %11 : vector<1x128xf32> to vector<8x128xf32>
    %13 = arith.mulf %10, %12 : vector<8x128xf32>
    %cst_9 = arith.constant dense<0.000000e+00> : vector<8xf32>
    %14 = vector.multi_reduction <add>, %13, %cst_9 [1] : vector<8x128xf32> to vector<8xf32>
    %15 = vector.shape_cast %14 : vector<8xf32> to vector<8x1xf32>
    %c0_10 = arith.constant 0 : index
    %16 = memref.load %arg5[%c0_10] : memref<1xf32, #tpu.memory_space<smem>>
    %17 = vector.broadcast %16 : f32 to vector<8x1xf32>
    %18 = arith.addf %15, %17 : vector<8x1xf32>
    %cst_11 = arith.constant 5.000000e-01 : f32
    %19 = vector.broadcast %cst_11 : f32 to vector<8x1xf32>
    %20 = arith.mulf %19, %18 : vector<8x1xf32>
    %21 = math.tanh %20 : vector<8x1xf32>
    %cst_12 = arith.constant 1.000000e+00 : f32
    %22 = vector.broadcast %cst_12 : f32 to vector<8x1xf32>
    %23 = arith.addf %21, %22 : vector<8x1xf32>
    %cst_13 = arith.constant 5.000000e-01 : f32
    %24 = vector.broadcast %cst_13 : f32 to vector<8x1xf32>
    %25 = arith.mulf %24, %23 : vector<8x1xf32>
    %26 = vector.shape_cast %25 : vector<8x1xf32> to vector<8x1xf32>
    %27 = vector.broadcast %26 : vector<8x1xf32> to vector<8x128xf32>
    %c0_14 = arith.constant 0 : index
    %c0_15 = arith.constant 0 : index
    %28 = vector.load %arg6[%c0_14, %c0_15] : memref<8x128xf32, #tpu.memory_space<vmem>>, vector<8x128xf32>
    tpu.vector_store %arg6[%c0_14, %c0_15], %27 {strides = array<i32>} : memref<8x128xf32, #tpu.memory_space<vmem>>, vector<8x128xf32>,
    return
  }
  func.func @transform_0(%arg0: i32) -> (i32, i32) {
    %c0_i32 = arith.constant 0 : i32
    %c0_i32_0 = arith.constant 0 : i32
    return %arg0, %c0_i32 : i32, i32
  }
  func.func @transform_1(%arg0: i32) -> (i32, i32) {
    %c0_i32 = arith.constant 0 : i32
    %c0_i32_0 = arith.constant 0 : i32
    %c0_i32_1 = arith.constant 0 : i32
    return %c0_i32, %c0_i32_0 : i32, i32
  }
  func.func @transform_2(%arg0: i32) -> (i32, i32) {
    %c0_i32 = arith.constant 0 : i32
    %c0_i32_0 = arith.constant 0 : i32
    %c0_i32_1 = arith.constant 0 : i32
    return %c0_i32, %c0_i32_0 : i32, i32
  }
  func.func @transform_3(%arg0: i32) -> (i32, i32) {
    %c0_i32 = arith.constant 0 : i32
    %c0_i32_0 = arith.constant 0 : i32
    %c0_i32_1 = arith.constant 0 : i32
    return %c0_i32, %c0_i32_0 : i32, i32
  }
  func.func @transform_4(%arg0: i32) -> i32 {
    %c0_i32 = arith.constant 0 : i32
    %c0_i32_0 = arith.constant 0 : i32
    return %c0_i32 : i32
  }
  func.func @transform_5(%arg0: i32) -> (i32, i32) {
    %c0_i32 = arith.constant 0 : i32
    %c0_i32_0 = arith.constant 0 : i32
    return %arg0, %c0_i32 : i32, i32
  }
}

</mosaic_0001>

<llo_original>
// kernel: tpu_custom_call.1
$region0: #{tpu_custom_call.1}
  #allocation0 [shape = 'u32[]', space=smem, size = 0x4, offset = 0x4, fixed_abs, tag = 'smem constant byte address 0x4 - core index']
  #allocation1 [shape = 'u32[144,128]{1,0:T(1,128)}', space=vmem, size = 0x12000, scoped, tag = 'internal scratch']
  #allocation2 [shape = 'f32[1]{0:T(128)S(6)}', space=smem, size = 0x200, scoped, tag = 'scoped memory for tpu_custom_call.1']
  %s0 = inlined_call_operand.hbm [shape: f32[24,256], index: 0, kind: input, shape index: {}]
  %s1 = inlined_call_operand.hbm [shape: f32[256,128], index: 1, kind: input, shape index: {}]
  %s2 = inlined_call_operand.vmem [shape: f32[1,128], index: 2, kind: input, shape index: {}]
  %s3 = inlined_call_operand.vmem [shape: f32[1,128], index: 3, kind: input, shape index: {}]
  %s4 = inlined_call_operand.<no memory space> [shape: f32[1], index: 4, kind: input, shape index: {}]
  %s5 = inlined_call_operand.hbm [shape: f32[24,128], index: 5, kind: output, shape index: {}]
  %s6 = sld [smem:[#allocation0]]
  $region61: #{tpu_custom_call.1} parent=0
    _
  %s8 = ssub.s32 1, %s6
  %s9 = scalar_select 0, %s8, %s6
  %10 = sst [smem:[#allocation2]] %s4
  $region1: #{tpu_custom_call.1} parent=0
    #allocation3 [shape = 'u8[16384]{0}', space=vmem, size = 0x4000, scoped, tag = 'input window, operand 0']
    #allocation4 [shape = 's32[2]{0}', space=sflag, size = 0x8, scoped, tag = 'scoped memory for tpu_custom_call.1']
    #allocation5 [shape = 's32[2]{0}', space=sflag, size = 0x8, scoped, tag = 'scoped memory for tpu_custom_call.1']
    #allocation6 [shape = 'u8[131072]{0}', space=vmem, size = 0x20000, scoped, tag = 'input window, operand 1, single buffered']
    #allocation7 [shape = 's32[1]{0}', space=sflag, size = 0x4, scoped, tag = 'scoped memory for tpu_custom_call.1']
    #allocation8 [shape = 'u8[8192]{0}', space=vmem, size = 0x2000, scoped, tag = 'output window, operand 0']
    %11 = vsyncpa [#allocation4], 0
    %s12 = scalar_lea.sflag [#allocation4], 1
    %13 = vsyncpa %s12, 0
    %14 = vsyncpa [#allocation7], 0
    %15 = vsyncpa [#allocation5], 0
    %s16 = scalar_lea.sflag [#allocation5], 1
    %17 = vsyncpa %s16, 0
    loop: start=0, step=1, limit=5
    $region2: #{tpu_custom_call.1} parent=1 // loop_pre_header
      _
    $region3: #{tpu_custom_call.1} parent=1 // loop_header
      %s19 = sphi 0, %s23
      %p20 = scmp.ge.s32.totalorder %s19, 5
      %s29 = sphi 0, %s31
      %s32 = sphi 0, %s29
      %s33 = sphi 0, %s32
      %s49 = sphi 0, %s33
      %s53 = sphi 0, %s53
      %s55 = sphi 0, %s53
      %s56 = sphi 0, %s55
      %s70 = sphi 0, %s56
      %s74 = sphi 0, %s74
      %s76 = sphi 0, %s74
      %s77 = sphi 0, %s76
      %s91 = sphi 0, %s77
      %s95 = sphi 0, %s95
      %s97 = sphi 0, %s95
      %s98 = sphi 0, %s97
      %s112 = sphi 0, %s98
      %s116 = sphi 0, %s116
      %s118 = sphi 0, %s116
      %s119 = sphi 0, %s118
      %s133 = sphi 0, %s119
      %s139 = sphi 0, %s141
      %s142 = sphi 0, %s139
      %s143 = sphi 0, %s142
      %s159 = sphi 0, %s143
    $region4: #{tpu_custom_call.1} parent=1 // loop_header_branch
      %22 = sbr.rel (%p20) target = $region8
    $region5: #{tpu_custom_call.1} parent=1 // loop_body
      %s24 = ssub.s32 %s19, 1
      %s25 = ssub.s32 %s19, 2
      %s26 = sadd.s32 %s19, 1
      %s27 = ssub.s32 %s19, %s26
      %p28 = scmp.eq.s32.totalorder %s27, 0
      %s30 = sadd.s32 %s29, 1
      %s31 = scalar_select %p28, %s29, %s30
      %p34 = pneg %p28
      %p35 = scmp.eq.s32.totalorder %s19, 2
      %p36 = por %p34, %p35
      %p37 = scmp.ne.s32.totalorder %s29, %s32
      %p38 = scmp.eq.s32.totalorder %s19, 0
      %p39 = por %p37, %p38
      %p40 = scmp.ne.s32.totalorder %s29, %s32
      %p41 = scmp.eq.s32.totalorder %s24, 2
      %p42 = por %p40, %p41
      %p43 = scmp.ne.s32.totalorder %s32, %s33
      %p44 = scmp.eq.s32.totalorder %s24, 0
      %p45 = por %p43, %p44
      %p46 = scmp.ne.s32.totalorder %s32, %s33
      %p47 = scmp.eq.s32.totalorder %s25, 2
      %p48 = por %p46, %p47
      %p50 = scmp.ne.s32.totalorder %s33, %s49
      %p51 = scmp.eq.s32.totalorder %s25, 0
      %p52 = por %p50, %p51
      %s54 = sadd.s32 %s53, 1
      %p57 = scmp.eq.s32.totalorder %s19, 2
      %p58 = scmp.ne.s32.totalorder %s53, %s55
      %p59 = scmp.eq.s32.totalorder %s19, 0
      %p60 = por %p58, %p59
      %p61 = scmp.ne.s32.totalorder %s53, %s55
      %p62 = scmp.eq.s32.totalorder %s24, 2
      %p63 = por %p61, %p62
      %p64 = scmp.ne.s32.totalorder %s55, %s56
      %p65 = scmp.eq.s32.totalorder %s24, 0
      %p66 = por %p64, %p65
      %p67 = scmp.ne.s32.totalorder %s55, %s56
      %p68 = scmp.eq.s32.totalorder %s25, 2
      %p69 = por %p67, %p68
      %p71 = scmp.ne.s32.totalorder %s56, %s70
      %p72 = scmp.eq.s32.totalorder %s25, 0
      %p73 = por %p71, %p72
      %s75 = sadd.s32 %s74, 1
      %p78 = scmp.eq.s32.totalorder %s19, 2
      %p79 = scmp.ne.s32.totalorder %s74, %s76
      %p80 = scmp.eq.s32.totalorder %s19, 0
      %p81 = por %p79, %p80
      %p82 = scmp.ne.s32.totalorder %s74, %s76
      %p83 = scmp.eq.s32.totalorder %s24, 2
      %p84 = por %p82, %p83
      %p85 = scmp.ne.s32.totalorder %s76, %s77
      %p86 = scmp.eq.s32.totalorder %s24, 0
      %p87 = por %p85, %p86
      %p88 = scmp.ne.s32.totalorder %s76, %s77
      %p89 = scmp.eq.s32.totalorder %s25, 2
      %p90 = por %p88, %p89
      %p92 = scmp.ne.s32.totalorder %s77, %s91
      %p93 = scmp.eq.s32.totalorder %s25, 0
      %p94 = por %p92, %p93
      %s96 = sadd.s32 %s95, 1
      %p99 = scmp.eq.s32.totalorder %s19, 2
      %p100 = scmp.ne.s32.totalorder %s95, %s97
      %p101 = scmp.eq.s32.totalorder %s19, 0
      %p102 = por %p100, %p101
      %p103 = scmp.ne.s32.totalorder %s95, %s97
      %p104 = scmp.eq.s32.totalorder %s24, 2
      %p105 = por %p103, %p104
      %p106 = scmp.ne.s32.totalorder %s97, %s98
      %p107 = scmp.eq.s32.totalorder %s24, 0
      %p108 = por %p106, %p107
      %p109 = scmp.ne.s32.totalorder %s97, %s98
      %p110 = scmp.eq.s32.totalorder %s25, 2
      %p111 = por %p109, %p110
      %p113 = scmp.ne.s32.totalorder %s98, %s112
      %p114 = scmp.eq.s32.totalorder %s25, 0
      %p115 = por %p113, %p114
      %s117 = sadd.s32 %s116, 1
      %p120 = scmp.eq.s32.totalorder %s19, 2
      %p121 = scmp.ne.s32.totalorder %s116, %s118
      %p122 = scmp.eq.s32.totalorder %s19, 0
      %p123 = por %p121, %p122
      %p124 = scmp.ne.s32.totalorder %s116, %s118
      %p125 = scmp.eq.s32.totalorder %s24, 2
      %p126 = por %p124, %p125
      %p127 = scmp.ne.s32.totalorder %s118, %s119
      %p128 = scmp.eq.s32.totalorder %s24, 0
      %p129 = por %p127, %p128
      %p130 = scmp.ne.s32.totalorder %s118, %s119
      %p131 = scmp.eq.s32.totalorder %s25, 2
      %p132 = por %p130, %p131
      %p134 = scmp.ne.s32.totalorder %s119, %s133
      %p135 = scmp.eq.s32.totalorder %s25, 0
      %p136 = por %p134, %p135
      %s137 = ssub.s32 %s19, %s26
      %p138 = scmp.eq.s32.totalorder %s137, 0
      %s140 = sadd.s32 %s139, 1
      %s141 = scalar_select %p138, %s139, %s140
      %p144 = pneg %p138
      %p145 = scmp.eq.s32.totalorder %s19, 2
      %p146 = por %p144, %p145
      %p147 = scmp.ne.s32.totalorder %s139, %s142
      %p148 = scmp.eq.s32.totalorder %s19, 0
      %p149 = por %p147, %p148
      %p150 = scmp.ne.s32.totalorder %s139, %s142
      %p151 = scmp.eq.s32.totalorder %s24, 2
      %p152 = por %p150, %p151
      %p153 = scmp.ne.s32.totalorder %s142, %s143
      %p154 = scmp.eq.s32.totalorder %s24, 0
      %p155 = por %p153, %p154
      %p156 = scmp.ne.s32.totalorder %s142, %s143
      %p157 = scmp.eq.s32.totalorder %s25, 2
      %p158 = por %p156, %p157
      %p160 = scmp.ne.s32.totalorder %s143, %s159
      %p161 = scmp.eq.s32.totalorder %s25, 0
      %p162 = por %p160, %p161
      %p163 = scmp.le.s32.totalorder 1, %s19
      %p164 = scmp.lt.s32.totalorder %s19, 4
      %p165 = pnand %p163, %p164
      %p166 = pneg %p165
      // Predicated region
      $region9: #{tpu_custom_call.1} parent=5 // pred_check
        _
      $region10: #{tpu_custom_call.1} parent=5 // pred_check_branch
        %168 = sbr.rel (%p165) target = $region12
      $region11: #{tpu_custom_call.1} parent=5 // pred_region
        %s169 = ssub.s32 %s19, 1
        // Predicated region
        $region13: #{tpu_custom_call.1} parent=11 // pred_check
          %p170 = pneg %p66
        $region14: #{tpu_custom_call.1} parent=11 // pred_check_branch
          %172 = sbr.rel (%p170) target = $region16
        $region15: #{tpu_custom_call.1} parent=11 // pred_region
          %s174 = ssub.s32 4096, 4096
          %175 = vsyncadd [#allocation7], %s174
          %s176 = sshll.u32 [#allocation6], 4
          %s177 = int_to_ptr.vmem [resolvable:$true] %s176
          %182 = dma.hbm_to_vmem [thread:$0]  %s1, 4096, %s177, [#allocation7], 128, 128, 8
        $region16: #{tpu_custom_call.1} parent=11 // pred_fallthru
          _
        // Predicated region
        $region17: #{tpu_custom_call.1} parent=11 // pred_check
          %p183 = pneg %p87
        $region18: #{tpu_custom_call.1} parent=11 // pred_check_branch
          %185 = sbr.rel (%p183) target = $region20
        $region19: #{tpu_custom_call.1} parent=11 // pred_region
          _
        $region20: #{tpu_custom_call.1} parent=11 // pred_fallthru
          _
        // Predicated region
        $region21: #{tpu_custom_call.1} parent=11 // pred_check
          %p186 = pneg %p108
        $region22: #{tpu_custom_call.1} parent=11 // pred_check_branch
          %188 = sbr.rel (%p186) target = $region24
        $region23: #{tpu_custom_call.1} parent=11 // pred_region
          _
        $region24: #{tpu_custom_call.1} parent=11 // pred_fallthru
          _
        // Predicated region
        $region25: #{tpu_custom_call.1} parent=11 // pred_check
          %p189 = pneg %p129
        $region26: #{tpu_custom_call.1} parent=11 // pred_check_branch
          %191 = sbr.rel (%p189) target = $region28
        $region27: #{tpu_custom_call.1} parent=11 // pred_region
          _
        $region28: #{tpu_custom_call.1} parent=11 // pred_fallthru
          _
      $region12: #{tpu_custom_call.1} parent=5 // pred_fallthru
        _
      %p192 = scmp.lt.s32.totalorder %s19, 3
      // Predicated region
      $region29: #{tpu_custom_call.1} parent=5 // pred_check
        %p193 = pneg %p192
      $region30: #{tpu_custom_call.1} parent=5 // pred_check_branch
        %195 = sbr.rel (%p193) target = $region32
      $region31: #{tpu_custom_call.1} parent=5 // pred_region
        // Predicated region
        $region33: #{tpu_custom_call.1} parent=31 // pred_check
          %p196 = pneg %p39
        $region34: #{tpu_custom_call.1} parent=31 // pred_check_branch
          %198 = sbr.rel (%p196) target = $region36
        $region35: #{tpu_custom_call.1} parent=31 // pred_region
          %s199 = sand.u32 %s29, 1
          %s200 = scalar_lea.sflag [#allocation4], %s199
          %s201 = sand.u32 %s29, 1
          %s202 = smul.addr %s201, 16
          %s203 = scalar_lea.vmem [#allocation3], %s202
          %s205 = ssub.s32 256, 256
          %206 = vsyncadd %s200, %s205
          %s207 = smul.addr %s19, 2
          %s208 = smul.addr %s207, 128
          %s209 = scalar_lea.hbm %s0, %s208
          %s211 = sshll.u32 %s203, 4
          %s212 = int_to_ptr.vmem [resolvable:$true] %s211
          %214 = dma.hbm_to_vmem [thread:$0]  %s209, 256, %s212, %s200
        $region36: #{tpu_custom_call.1} parent=31 // pred_fallthru
          _
      $region32: #{tpu_custom_call.1} parent=5 // pred_fallthru
        _
      %p215 = scmp.le.s32.totalorder 1, %s19
      %p216 = scmp.lt.s32.totalorder %s19, 4
      %p217 = pnand %p215, %p216
      %p218 = pneg %p217
      // Predicated region
      $region37: #{tpu_custom_call.1} parent=5 // pred_check
        _
      $region38: #{tpu_custom_call.1} parent=5 // pred_check_branch
        %220 = sbr.rel (%p217) target = $region40
      $region39: #{tpu_custom_call.1} parent=5 // pred_region
        %s221 = ssub.s32 %s19, 1
        %s222 = sand.u32 %s32, 1
        %s223 = scalar_lea.sflag [#allocation4], %s222
        %s224 = sand.u32 %s32, 1
        %s225 = smul.addr %s224, 16
        %s226 = scalar_lea.vmem [#allocation3], %s225
        // Predicated region
        $region41: #{tpu_custom_call.1} parent=39 // pred_check
          %p227 = pneg %p45
        $region42: #{tpu_custom_call.1} parent=39 // pred_check_branch
          %229 = sbr.rel (%p227) target = $region44
        $region43: #{tpu_custom_call.1} parent=39 // pred_region
          %230 = dma.done %s223, 256
        $region44: #{tpu_custom_call.1} parent=39 // pred_fallthru
          _
        // Predicated region
        $region45: #{tpu_custom_call.1} parent=39 // pred_check
          %p231 = pneg %p66
        $region46: #{tpu_custom_call.1} parent=39 // pred_check_branch
          %233 = sbr.rel (%p231) target = $region48
        $region47: #{tpu_custom_call.1} parent=39 // pred_region
          %234 = dma.done [#allocation7], 4096
        $region48: #{tpu_custom_call.1} parent=39 // pred_fallthru
          _
        %s235 = sand.u32 %s32, 1
        %s236 = scalar_lea.sflag [#allocation4], %s235
        %s237 = sand.u32 %s32, 1
        %s238 = smul.addr %s237, 16
        %s239 = scalar_lea.vmem [#allocation3], %s238
        %p240 = pneg %p45
        %p241 = pneg %p42
        %p242 = pneg %p66
        %p243 = pneg %p63
        %p244 = pneg %p87
        %p245 = pneg %p84
        %p246 = pneg %p108
        %p247 = pneg %p105
        %p248 = pneg %p129
        %p249 = pneg %p126
        %p250 = pneg %p155
        %p251 = pneg %p152
        %s252 = sand.u32 %s142, 1
        %s253 = scalar_lea.sflag [#allocation5], %s252
        %s254 = sand.u32 %s142, 1
        %s255 = smul.addr %s254, 8
        %s256 = scalar_lea.vmem [#allocation8], %s255
        %v257 = vld [vmem:[%s226] sm:$0xff]
        %v258 = vld [vmem:[%s226 + $0x8] sm:$0xff]
        %v259 = vld [vmem:[#allocation6] sm:$0xff]
        %v260 = vld [vmem:[#allocation6 + $0x8] sm:$0xff]
        %v261 = vld [vmem:[#allocation6 + $0x10] sm:$0xff]
        %v262 = vld [vmem:[#allocation6 + $0x18] sm:$0xff]
        %v263 = vld [vmem:[#allocation6 + $0x20] sm:$0xff]
        %v264 = vld [vmem:[#allocation6 + $0x28] sm:$0xff]
        %v265 = vld [vmem:[#allocation6 + $0x30] sm:$0xff]
        %v266 = vld [vmem:[#allocation6 + $0x38] sm:$0xff]
        %v267 = vld [vmem:[#allocation6 + $0x40] sm:$0xff]
        %v268 = vld [vmem:[#allocation6 + $0x48] sm:$0xff]
        %v269 = vld [vmem:[#allocation6 + $0x50] sm:$0xff]
        %v270 = vld [vmem:[#allocation6 + $0x58] sm:$0xff]
        %v271 = vld [vmem:[#allocation6 + $0x60] sm:$0xff]
        %v272 = vld [vmem:[#allocation6 + $0x68] sm:$0xff]
        %v273 = vld [vmem:[#allocation6 + $0x70] sm:$0xff]
        %v274 = vld [vmem:[#allocation6 + $0x78] sm:$0xff]
        %v275 = vld [vmem:[#allocation6 + $0x80] sm:$0xff]
        %v276 = vld [vmem:[#allocation6 + $0x88] sm:$0xff]
        %v277 = vld [vmem:[#allocation6 + $0x90] sm:$0xff]
        %v278 = vld [vmem:[#allocation6 + $0x98] sm:$0xff]
        %v279 = vld [vmem:[#allocation6 + $0xa0] sm:$0xff]
        %v280 = vld [vmem:[#allocation6 + $0xa8] sm:$0xff]
        %v281 = vld [vmem:[#allocation6 + $0xb0] sm:$0xff]
        %v282 = vld [vmem:[#allocation6 + $0xb8] sm:$0xff]
        %v283 = vld [vmem:[#allocation6 + $0xc0] sm:$0xff]
        %v284 = vld [vmem:[#allocation6 + $0xc8] sm:$0xff]
        %v285 = vld [vmem:[#allocation6 + $0xd0] sm:$0xff]
        %v286 = vld [vmem:[#allocation6 + $0xd8] sm:$0xff]
        %v287 = vld [vmem:[#allocation6 + $0xe0] sm:$0xff]
        %v288 = vld [vmem:[#allocation6 + $0xe8] sm:$0xff]
        %v289 = vld [vmem:[#allocation6 + $0xf0] sm:$0xff]
        %v290 = vld [vmem:[#allocation6 + $0xf8] sm:$0xff]
        %v291 = vld [vmem:[%s2] sm:$0x1]
        %v293 = vlaneseq
        %v294 = vshrl.u32 %v293, 7
        %v295 = vsub.s32 0, %v294
        %v296 = vrot.slane %v291, %v295
        %298 = vmatprep.subr.mxu0 0.0
        %299 = vmatpush1.msra.mxu0 %v259
        %300 = vmatprep.subr.mxu0 0.0
        %301 = vmatpush1.msra.mxu0 %v260
        %302 = vmatprep.subr.mxu0 0.0
        %303 = vmatpush1.msra.mxu0 %v261
        %304 = vmatprep.subr.mxu0 0.0
        %305 = vmatpush1.msra.mxu0 %v262
        %306 = vmatprep.subr.mxu0 0.0
        %307 = vmatpush1.msra.mxu0 %v263
        %308 = vmatprep.subr.mxu0 0.0
        %309 = vmatpush1.msra.mxu0 %v264
        %310 = vmatprep.subr.mxu0 0.0
        %311 = vmatpush1.msra.mxu0 %v265
        %312 = vmatprep.subr.mxu0 0.0
        %313 = vmatpush1.msra.mxu0 %v266
        %314 = vmatprep.subr.mxu0 0.0
        %315 = vmatpush1.msra.mxu0 %v267
        %316 = vmatprep.subr.mxu0 0.0
        %317 = vmatpush1.msra.mxu0 %v268
        %318 = vmatprep.subr.mxu0 0.0
        %319 = vmatpush1.msra.mxu0 %v269
        %320 = vmatprep.subr.mxu0 0.0
        %321 = vmatpush1.msra.mxu0 %v270
        %322 = vmatprep.subr.mxu0 0.0
        %323 = vmatpush1.msra.mxu0 %v271
        %324 = vmatprep.subr.mxu0 0.0
        %325 = vmatpush1.msra.mxu0 %v272
        %326 = vmatprep.subr.mxu0 0.0
        %327 = vmatpush1.msra.mxu0 %v273
        %328 = vmatprep.subr.mxu0 0.0
        %329 = vmatpush1.msra.mxu0 %v274
        %330 = vmatprep.subr.mxu0 0.0
        %331 = vmatpush1.msra.mxu0 %v275
        %332 = vmatprep.subr.mxu0 0.0
        %333 = vmatpush1.msra.mxu0 %v276
        %334 = vmatprep.subr.mxu0 0.0
        %335 = vmatpush1.msra.mxu0 %v277
        %336 = vmatprep.subr.mxu0 0.0
        %337 = vmatpush1.msra.mxu0 %v278
        %338 = vmatprep.subr.mxu0 0.0
        %339 = vmatpush1.msra.mxu0 %v279
        %340 = vmatprep.subr.mxu0 0.0
        %341 = vmatpush1.msra.mxu0 %v280
        %342 = vmatprep.subr.mxu0 0.0
        %343 = vmatpush1.msra.mxu0 %v281
        %344 = vmatprep.subr.mxu0 0.0
        %345 = vmatpush1.msra.mxu0 %v282
        %346 = vmatprep.subr.mxu0 0.0
        %347 = vmatpush1.msra.mxu0 %v283
        %348 = vmatprep.subr.mxu0 0.0
        %349 = vmatpush1.msra.mxu0 %v284
        %350 = vmatprep.subr.mxu0 0.0
        %351 = vmatpush1.msra.mxu0 %v285
        %352 = vmatprep.subr.mxu0 0.0
        %353 = vmatpush1.msra.mxu0 %v286
        %354 = vmatprep.subr.mxu0 0.0
        %355 = vmatpush1.msra.mxu0 %v287
        %356 = vmatprep.subr.mxu0 0.0
        %357 = vmatpush1.msra.mxu0 %v288
        %358 = vmatprep.subr.mxu0 0.0
        %359 = vmatpush1.msra.mxu0 %v289
        %360 = vmatprep.subr.mxu0 0.0
        %361 = vmatpush1.msra.mxu0 %v290
        %362 = vmatprep.mubr.f32.mxu0 %v258
        %363 = vmatmul.mubr.f32.gmra.mrb[0].mxu0 %v257
        %v364 = vpop.f32.mrb[0].mxu0
        %v365 = vadd.f32 %v296, %v364
        %v366 = vpop.f32.mrb[0].mxu0
        %367 = vdwg.mxu0
        %vm368 = vcmp.gt.f32.partialorder %v365, 0.0
        %v369 = vmul.f32 %v365, 0.1
        %v370 = vsel %vm368, %v365, %v369
        %v371 = vld [vmem:[%s3] sm:$0x1]
        %v373 = vlaneseq
        %v374 = vshrl.u32 %v373, 7
        %v375 = vsub.s32 0, %v374
        %v376 = vrot.slane %v371, %v375
        %v378 = vmul.f32 %v370, %v376
        %379 = vadd.xlane.f32.xlu0 %v378
        %v380 = vpop.xlane.xlu0 %379
        %s381 = sld [smem:[#allocation2]]
        %v382 = vstv %s381
        %v383 = vadd.f32 %v380, %v382
        %v384 = vmul.f32 %v383, 0.5
        %v385 = vtanh.pop %v384
        %v386 = vadd.f32 %v385, 1.0
        %v387 = vmul.f32 %v386, 0.5
        %388 = vst [vmem:[%s256] sm:$0xff] %v387
        %s389 = sand.u32 %s142, 1
        %s390 = scalar_lea.sflag [#allocation5], %s389
        %s391 = sand.u32 %s142, 1
        %s392 = smul.addr %s391, 8
        %s393 = scalar_lea.vmem [#allocation8], %s392
        // Predicated region
        $region49: #{tpu_custom_call.1} parent=39 // pred_check
          %p394 = pneg %p152
        $region50: #{tpu_custom_call.1} parent=39 // pred_check_branch
          %396 = sbr.rel (%p394) target = $region52
        $region51: #{tpu_custom_call.1} parent=39 // pred_region
          %s398 = ssub.s32 128, 128
          %399 = vsyncadd %s390, %s398
          %s400 = smul.addr %s24, 128
          %s401 = scalar_lea.hbm %s5, %s400
          %s403 = sshll.u32 %s393, 4
          %s404 = int_to_ptr.vmem [resolvable:$true] %s403
          %406 = dma.vmem_to_hbm [thread:$0]  %s404, 128, %s401, %s390
        $region52: #{tpu_custom_call.1} parent=39 // pred_fallthru
          _
      $region40: #{tpu_custom_call.1} parent=5 // pred_fallthru
        _
      %p407 = scmp.le.s32.totalorder 2, %s19
      // Predicated region
      $region53: #{tpu_custom_call.1} parent=5 // pred_check
        %p408 = pneg %p407
      $region54: #{tpu_custom_call.1} parent=5 // pred_check_branch
        %410 = sbr.rel (%p408) target = $region56
      $region55: #{tpu_custom_call.1} parent=5 // pred_region
        %s411 = ssub.s32 %s19, 2
        // Predicated region
        $region57: #{tpu_custom_call.1} parent=55 // pred_check
          %p412 = pneg %p158
        $region58: #{tpu_custom_call.1} parent=55 // pred_check_branch
          %414 = sbr.rel (%p412) target = $region60
        $region59: #{tpu_custom_call.1} parent=55 // pred_region
          %s415 = sand.u32 %s143, 1
          %s416 = scalar_lea.sflag [#allocation5], %s415
          %s417 = sand.u32 %s143, 1
          %s418 = smul.addr %s417, 8
          %s419 = scalar_lea.vmem [#allocation8], %s418
          %420 = dma.done %s416, 128
        $region60: #{tpu_custom_call.1} parent=55 // pred_fallthru
          _
      $region56: #{tpu_custom_call.1} parent=5 // pred_fallthru
        _
    $region6: #{tpu_custom_call.1} parent=1 // loop_footer
      %s23 = sadd.s32 1, %s19
    $region7: #{tpu_custom_call.1} parent=1 // loop_footer_branch
      %18 = sbr.rel target = $region3
    $region8: #{tpu_custom_call.1} parent=1 // loop_exit
      _
    %421 = vsyncpa [#allocation4], 1
    %s422 = scalar_lea.sflag [#allocation4], 1
    %423 = vsyncpa %s422, 1
    %424 = vsyncpa [#allocation7], 1
    %425 = vsyncpa [#allocation5], 1
    %s426 = scalar_lea.sflag [#allocation5], 1
    %427 = vsyncpa %s426, 1

</llo_original>
